<compile_context>
chip_gen: v6e
topology: v6e:2x2x1
jax: 0.10.0
libtpu: 0.0.40
codegen_flags: <defaults>
</compile_context>

<pallas_src>
import jax
import jax.numpy as jnp
from jax.experimental import pallas as pl
from jax.experimental.pallas import tpu as pltpu

FEAT = 2048
EPS = 1e-5
# f32: 256 * 2048 * 4 B = 2 MiB per block; input + output double-buffered is
# ~8 MiB -> fits default scoped VMEM on all of v5e / v6e / v7x (no flags).
ROW_TILE_MAX = 256
_INV_FEAT = 1.0 / FEAT


def _round_up(n, m):
    return ((n + m - 1) // m) * m


def layernorm_kernel(x_ref, g_ref, b_ref, o_ref):
    # x_ref: (row_tile, FEAT), g_ref/b_ref: (1, FEAT)
    x = x_ref[...].astype(jnp.float32)

    # One-pass statistics: sum(x) and sum(x*x) in a single sweep.
    s = jnp.sum(x, axis=-1, keepdims=True)
    sq = jnp.sum(x * x, axis=-1, keepdims=True)
    mean = s * _INV_FEAT
    # Clamp at 0: E[x^2] - mean^2 can go slightly negative from cancellation.
    var = jnp.maximum(sq * _INV_FEAT - mean * mean, 0.0)
    inv = jax.lax.rsqrt(var + EPS)

    # Hoisted casts (gamma/beta blocks are not re-DMA'd: constant index_map).
    g32 = g_ref[...].astype(jnp.float32)
    b32 = b_ref[...].astype(jnp.float32)

    o_ref[...] = ((x - mean) * inv * g32 + b32).astype(o_ref.dtype)


def _pick_row_tile(rows):
    # Big tiles for bandwidth, but keep >= 2 grid steps when rows allow it so
    # the "parallel" grid axis can still be split across v7x's 2 TensorCores.
    half = max(8, _round_up(pl.cdiv(rows, 2), 8))
    return min(ROW_TILE_MAX, half)


def layernorm_pallas(x, gamma, beta):
    orig_shape = x.shape
    assert orig_shape[-1] == FEAT
    rows = 1
    for d in orig_shape[:-1]:
        rows *= d

    x2 = x.reshape(rows, FEAT)
    g2 = gamma.reshape(1, FEAT)
    b2 = beta.reshape(1, FEAT)

    row_tile = _pick_row_tile(rows)
    padded_rows = _round_up(rows, row_tile)
    if padded_rows != rows:
        # Zero-padded rows are harmless: mean=0, var=0 -> rsqrt(eps) is finite,
        # and the padded outputs are sliced off below.
        x2 = jnp.pad(x2, ((0, padded_rows - rows), (0, 0)))

    grid = (padded_rows // row_tile,)

    out = pl.pallas_call(
        layernorm_kernel,
        out_shape=jax.ShapeDtypeStruct((padded_rows, FEAT), x.dtype),
        grid_spec=pltpu.PrefetchScalarGridSpec(
            num_scalar_prefetch=0,
            grid=grid,
            in_specs=[
                pl.BlockSpec((row_tile, FEAT), lambda i: (i, 0)),
                pl.BlockSpec((1, FEAT), lambda i: (0, 0)),
                pl.BlockSpec((1, FEAT), lambda i: (0, 0)),
            ],
            out_specs=pl.BlockSpec((row_tile, FEAT), lambda i: (i, 0)),
        ),
        compiler_params=pltpu.CompilerParams(
            dimension_semantics=("parallel",),
        ),
    )(x2, g2, b2)

    if padded_rows != rows:
        out = out[:rows]
    return out.reshape(orig_shape)


def _reference(x, gamma, beta):
    mean = jnp.mean(x, axis=-1, keepdims=True)
    var = jnp.mean((x - mean) ** 2, axis=-1, keepdims=True)
    return (x - mean) * jax.lax.rsqrt(var + EPS) * gamma + beta


if __name__ == "__main__":
    key = jax.random.PRNGKey(0)

    # nn.LayerNorm(2048) default init: weight=1, bias=0 (deterministic)
    gamma = jnp.ones((FEAT,), dtype=jnp.float32)
    beta = jnp.zeros((FEAT,), dtype=jnp.float32)

    # Small shape consistent with LayerNorm(2048): (batch=2, seq=8, 2048)
    x = jax.random.normal(key, (2, 8, FEAT), dtype=jnp.float32)
    out = jax.block_until_ready(layernorm_pallas(x, gamma, beta))
    assert jnp.allclose(out, _reference(x, gamma, beta), atol=1e-4, rtol=1e-4)

    # Ragged row count (3*5 = 15 rows) exercises the cdiv + padding path.
    x2 = jax.random.normal(jax.random.PRNGKey(1), (3, 5, FEAT), dtype=jnp.float32)
    out2 = jax.block_until_ready(layernorm_pallas(x2, gamma, beta))
    assert jnp.allclose(out2, _reference(x2, gamma, beta), atol=1e-4, rtol=1e-4)

    print("KERNEL_OK")
</pallas_src>

<mosaic_0001>
module attributes {stable_mosaic.version = 11 : i64} {
  func.func @layernorm_kernel(%arg0: i32, %arg1: memref<8x2048xf32, #tpu.memory_space<vmem>>, %arg2: memref<1x2048xf32, #tpu.memory_space<vmem>>, %arg3: memref<1x2048xf32, #tpu.memory_space<vmem>>, %arg4: memref<8x2048xf32, #tpu.memory_space<vmem>>) attributes {dimension_semantics = [#tpu.dimension_semantics<parallel>], iteration_bounds = array<i64: 2>, scalar_prefetch = 0 : i64, scratch_operands = 0 : i64, tpu.core_type = #tpu.core_type<tc>, window_params = [{transform_indices = @transform_0, window_bounds = array<i64: 8, 2048>}, {pipeline_mode = #tpu.pipeline_mode<synchronous>, transform_indices = @transform_1, window_bounds = array<i64: 1, 2048>}, {pipeline_mode = #tpu.pipeline_mode<synchronous>, transform_indices = @transform_2, window_bounds = array<i64: 1, 2048>}, {transform_indices = @transform_3, window_bounds = array<i64: 8, 2048>}]} {
    %c0 = arith.constant 0 : index
    %c0_0 = arith.constant 0 : index
    %0 = vector.load %arg1[%c0, %c0_0] : memref<8x2048xf32, #tpu.memory_space<vmem>>, vector<8x2048xf32>
    %cst = arith.constant dense<0.000000e+00> : vector<8xf32>
    %1 = vector.multi_reduction <add>, %0, %cst [1] : vector<8x2048xf32> to vector<8xf32>
    %2 = vector.shape_cast %1 : vector<8xf32> to vector<8x1xf32>
    %3 = arith.mulf %0, %0 : vector<8x2048xf32>
    %cst_1 = arith.constant dense<0.000000e+00> : vector<8xf32>
    %4 = vector.multi_reduction <add>, %3, %cst_1 [1] : vector<8x2048xf32> to vector<8xf32>
    %5 = vector.shape_cast %4 : vector<8xf32> to vector<8x1xf32>
    %cst_2 = arith.constant 4.8828125E-4 : f32
    %6 = vector.broadcast %cst_2 : f32 to vector<8x1xf32>
    %7 = arith.mulf %2, %6 : vector<8x1xf32>
    %cst_3 = arith.constant 4.8828125E-4 : f32
    %8 = vector.broadcast %cst_3 : f32 to vector<8x1xf32>
    %9 = arith.mulf %5, %8 : vector<8x1xf32>
    %10 = arith.mulf %7, %7 : vector<8x1xf32>
    %11 = arith.subf %9, %10 : vector<8x1xf32>
    %cst_4 = arith.constant 0.000000e+00 : f32
    %12 = vector.broadcast %cst_4 : f32 to vector<8x1xf32>
    %13 = arith.maximumf %11, %12 : vector<8x1xf32>
    %cst_5 = arith.constant 9.99999974E-6 : f32
    %14 = vector.broadcast %cst_5 : f32 to vector<8x1xf32>
    %15 = arith.addf %13, %14 : vector<8x1xf32>
    %16 = math.rsqrt %15 : vector<8x1xf32>
    %c0_6 = arith.constant 0 : index
    %c0_7 = arith.constant 0 : index
    %17 = vector.load %arg2[%c0_6, %c0_7] : memref<1x2048xf32, #tpu.memory_space<vmem>>, vector<1x2048xf32>
    %c0_8 = arith.constant 0 : index
    %c0_9 = arith.constant 0 : index
    %18 = vector.load %arg3[%c0_8, %c0_9] : memref<1x2048xf32, #tpu.memory_space<vmem>>, vector<1x2048xf32>
    %19 = vector.broadcast %7 : vector<8x1xf32> to vector<8x2048xf32>
    %20 = arith.subf %0, %19 : vector<8x2048xf32>
    %21 = vector.broadcast %16 : vector<8x1xf32> to vector<8x2048xf32>
    %22 = arith.mulf %20, %21 : vector<8x2048xf32>
    %23 = vector.broadcast %17 : vector<1x2048xf32> to vector<8x2048xf32>
    %24 = arith.mulf %22, %23 : vector<8x2048xf32>
    %25 = vector.broadcast %18 : vector<1x2048xf32> to vector<8x2048xf32>
    %26 = arith.addf %24, %25 : vector<8x2048xf32>
    %c0_10 = arith.constant 0 : index
    %c0_11 = arith.constant 0 : index
    %27 = vector.load %arg4[%c0_10, %c0_11] : memref<8x2048xf32, #tpu.memory_space<vmem>>, vector<8x2048xf32>
    tpu.vector_store %arg4[%c0_10, %c0_11], %26 {strides = array<i32>} : memref<8x2048xf32, #tpu.memory_space<vmem>>, vector<8x2048xf32>,
    return
  }
  func.func @transform_0(%arg0: i32) -> (i32, i32) {
    %c0_i32 = arith.constant 0 : i32
    %c0_i32_0 = arith.constant 0 : i32
    return %arg0, %c0_i32 : i32, i32
  }
  func.func @transform_1(%arg0: i32) -> (i32, i32) {
    %c0_i32 = arith.constant 0 : i32
    %c0_i32_0 = arith.constant 0 : i32
    %c0_i32_1 = arith.constant 0 : i32
    return %c0_i32, %c0_i32_0 : i32, i32
  }
  func.func @transform_2(%arg0: i32) -> (i32, i32) {
    %c0_i32 = arith.constant 0 : i32
    %c0_i32_0 = arith.constant 0 : i32
    %c0_i32_1 = arith.constant 0 : i32
    return %c0_i32, %c0_i32_0 : i32, i32
  }
  func.func @transform_3(%arg0: i32) -> (i32, i32) {
    %c0_i32 = arith.constant 0 : i32
    %c0_i32_0 = arith.constant 0 : i32
    return %arg0, %c0_i32 : i32, i32
  }
}

</mosaic_0001>

<llo_original>
// kernel: tpu_custom_call.1
$region0: #{tpu_custom_call.1}
  #allocation0 [shape = 'u32[]', space=smem, size = 0x4, offset = 0x4, fixed_abs, tag = 'smem constant byte address 0x4 - core index']
  #allocation1 [shape = 'u32[144,128]{1,0:T(1,128)}', space=vmem, size = 0x12000, scoped, tag = 'internal scratch']
  %s0 = inlined_call_operand.hbm [shape: f32[16,2048], index: 0, kind: input, shape index: {}]
  %s1 = inlined_call_operand.hbm [shape: f32[1,2048], index: 1, kind: input, shape index: {}]
  %s2 = inlined_call_operand.hbm [shape: f32[1,2048], index: 2, kind: input, shape index: {}]
  %s3 = inlined_call_operand.hbm [shape: f32[16,2048], index: 3, kind: output, shape index: {}]
  %s4 = sld [smem:[#allocation0]]
  $region57: #{tpu_custom_call.1} parent=0
    _
  %s6 = ssub.s32 1, %s4
  %s7 = scalar_select 0, %s6, %s4
  $region1: #{tpu_custom_call.1} parent=0
    #allocation2 [shape = 'u8[131072]{0}', space=vmem, size = 0x20000, scoped, tag = 'input window, operand 0']
    #allocation3 [shape = 's32[2]{0}', space=sflag, size = 0x8, scoped, tag = 'scoped memory for tpu_custom_call.1']
    #allocation4 [shape = 's32[2]{0}', space=sflag, size = 0x8, scoped, tag = 'scoped memory for tpu_custom_call.1']
    #allocation5 [shape = 'u8[8192]{0}', space=vmem, size = 0x2000, scoped, tag = 'input window, operand 1, single buffered']
    #allocation6 [shape = 's32[1]{0}', space=sflag, size = 0x4, scoped, tag = 'scoped memory for tpu_custom_call.1']
    #allocation7 [shape = 'u8[8192]{0}', space=vmem, size = 0x2000, scoped, tag = 'input window, operand 2, single buffered']
    #allocation8 [shape = 'u8[131072]{0}', space=vmem, size = 0x20000, scoped, tag = 'output window, operand 0']
    %8 = vsyncpa [#allocation3], 0
    %s9 = scalar_lea.sflag [#allocation3], 1
    %10 = vsyncpa %s9, 0
    %11 = vsyncpa [#allocation6], 0
    %12 = vsyncpa [#allocation4], 0
    %s13 = scalar_lea.sflag [#allocation4], 1
    %14 = vsyncpa %s13, 0
    loop: start=0, step=1, limit=4
    $region2: #{tpu_custom_call.1} parent=1 // loop_pre_header
      _
    $region3: #{tpu_custom_call.1} parent=1 // loop_header
      %s16 = sphi 0, %s20
      %p17 = scmp.ge.s32.totalorder %s16, 4
      %s26 = sphi 0, %s28
      %s29 = sphi 0, %s26
      %s30 = sphi 0, %s29
      %s46 = sphi 0, %s30
      %s50 = sphi 0, %s50
      %s52 = sphi 0, %s50
      %s53 = sphi 0, %s52
      %s67 = sphi 0, %s53
      %s71 = sphi 0, %s71
      %s73 = sphi 0, %s71
      %s74 = sphi 0, %s73
      %s88 = sphi 0, %s74
      %s94 = sphi 0, %s96
      %s97 = sphi 0, %s94
      %s98 = sphi 0, %s97
      %s114 = sphi 0, %s98
    $region4: #{tpu_custom_call.1} parent=1 // loop_header_branch
      %19 = sbr.rel (%p17) target = $region8
    $region5: #{tpu_custom_call.1} parent=1 // loop_body
      %s21 = ssub.s32 %s16, 1
      %s22 = ssub.s32 %s16, 2
      %s23 = sadd.s32 %s16, 1
      %s24 = ssub.s32 %s16, %s23
      %p25 = scmp.eq.s32.totalorder %s24, 0
      %s27 = sadd.s32 %s26, 1
      %s28 = scalar_select %p25, %s26, %s27
      %p31 = pneg %p25
      %p32 = scmp.eq.s32.totalorder %s16, 1
      %p33 = por %p31, %p32
      %p34 = scmp.ne.s32.totalorder %s26, %s29
      %p35 = scmp.eq.s32.totalorder %s16, 0
      %p36 = por %p34, %p35
      %p37 = scmp.ne.s32.totalorder %s26, %s29
      %p38 = scmp.eq.s32.totalorder %s21, 1
      %p39 = por %p37, %p38
      %p40 = scmp.ne.s32.totalorder %s29, %s30
      %p41 = scmp.eq.s32.totalorder %s21, 0
      %p42 = por %p40, %p41
      %p43 = scmp.ne.s32.totalorder %s29, %s30
      %p44 = scmp.eq.s32.totalorder %s22, 1
      %p45 = por %p43, %p44
      %p47 = scmp.ne.s32.totalorder %s30, %s46
      %p48 = scmp.eq.s32.totalorder %s22, 0
      %p49 = por %p47, %p48
      %s51 = sadd.s32 %s50, 1
      %p54 = scmp.eq.s32.totalorder %s16, 1
      %p55 = scmp.ne.s32.totalorder %s50, %s52
      %p56 = scmp.eq.s32.totalorder %s16, 0
      %p57 = por %p55, %p56
      %p58 = scmp.ne.s32.totalorder %s50, %s52
      %p59 = scmp.eq.s32.totalorder %s21, 1
      %p60 = por %p58, %p59
      %p61 = scmp.ne.s32.totalorder %s52, %s53
      %p62 = scmp.eq.s32.totalorder %s21, 0
      %p63 = por %p61, %p62
      %p64 = scmp.ne.s32.totalorder %s52, %s53
      %p65 = scmp.eq.s32.totalorder %s22, 1
      %p66 = por %p64, %p65
      %p68 = scmp.ne.s32.totalorder %s53, %s67
      %p69 = scmp.eq.s32.totalorder %s22, 0
      %p70 = por %p68, %p69
      %s72 = sadd.s32 %s71, 1
      %p75 = scmp.eq.s32.totalorder %s16, 1
      %p76 = scmp.ne.s32.totalorder %s71, %s73
      %p77 = scmp.eq.s32.totalorder %s16, 0
      %p78 = por %p76, %p77
      %p79 = scmp.ne.s32.totalorder %s71, %s73
      %p80 = scmp.eq.s32.totalorder %s21, 1
      %p81 = por %p79, %p80
      %p82 = scmp.ne.s32.totalorder %s73, %s74
      %p83 = scmp.eq.s32.totalorder %s21, 0
      %p84 = por %p82, %p83
      %p85 = scmp.ne.s32.totalorder %s73, %s74
      %p86 = scmp.eq.s32.totalorder %s22, 1
      %p87 = por %p85, %p86
      %p89 = scmp.ne.s32.totalorder %s74, %s88
      %p90 = scmp.eq.s32.totalorder %s22, 0
      %p91 = por %p89, %p90
      %s92 = ssub.s32 %s16, %s23
      %p93 = scmp.eq.s32.totalorder %s92, 0
      %s95 = sadd.s32 %s94, 1
      %s96 = scalar_select %p93, %s94, %s95
      %p99 = pneg %p93
      %p100 = scmp.eq.s32.totalorder %s16, 1
      %p101 = por %p99, %p100
      %p102 = scmp.ne.s32.totalorder %s94, %s97
      %p103 = scmp.eq.s32.totalorder %s16, 0
      %p104 = por %p102, %p103
      %p105 = scmp.ne.s32.totalorder %s94, %s97
      %p106 = scmp.eq.s32.totalorder %s21, 1
      %p107 = por %p105, %p106
      %p108 = scmp.ne.s32.totalorder %s97, %s98
      %p109 = scmp.eq.s32.totalorder %s21, 0
      %p110 = por %p108, %p109
      %p111 = scmp.ne.s32.totalorder %s97, %s98
      %p112 = scmp.eq.s32.totalorder %s22, 1
      %p113 = por %p111, %p112
      %p115 = scmp.ne.s32.totalorder %s98, %s114
      %p116 = scmp.eq.s32.totalorder %s22, 0
      %p117 = por %p115, %p116
      %p118 = scmp.le.s32.totalorder 1, %s16
      %p119 = scmp.lt.s32.totalorder %s16, 3
      %p120 = pnand %p118, %p119
      %p121 = pneg %p120
      // Predicated region
      $region9: #{tpu_custom_call.1} parent=5 // pred_check
        _
      $region10: #{tpu_custom_call.1} parent=5 // pred_check_branch
        %123 = sbr.rel (%p120) target = $region12
      $region11: #{tpu_custom_call.1} parent=5 // pred_region
        %s124 = ssub.s32 %s16, 1
        // Predicated region
        $region13: #{tpu_custom_call.1} parent=11 // pred_check
          %p125 = pneg %p63
        $region14: #{tpu_custom_call.1} parent=11 // pred_check_branch
          %127 = sbr.rel (%p125) target = $region16
        $region15: #{tpu_custom_call.1} parent=11 // pred_region
          %s129 = ssub.s32 256, 256
          %130 = vsyncadd [#allocation6], %s129
          %s132 = sshll.u32 [#allocation5], 4
          %s133 = int_to_ptr.vmem [resolvable:$true] %s132
          %135 = dma.hbm_to_vmem [thread:$0]  %s1, 256, %s133, [#allocation6]
        $region16: #{tpu_custom_call.1} parent=11 // pred_fallthru
          _
        // Predicated region
        $region17: #{tpu_custom_call.1} parent=11 // pred_check
          %p136 = pneg %p84
        $region18: #{tpu_custom_call.1} parent=11 // pred_check_branch
          %138 = sbr.rel (%p136) target = $region20
        $region19: #{tpu_custom_call.1} parent=11 // pred_region
          %s140 = ssub.s32 256, 256
          %141 = vsyncadd [#allocation6], %s140
          %s143 = sshll.u32 [#allocation7], 4
          %s144 = int_to_ptr.vmem [resolvable:$true] %s143
          %146 = dma.hbm_to_vmem [thread:$0]  %s2, 256, %s144, [#allocation6]
        $region20: #{tpu_custom_call.1} parent=11 // pred_fallthru
          _
      $region12: #{tpu_custom_call.1} parent=5 // pred_fallthru
        _
      %p147 = scmp.lt.s32.totalorder %s16, 2
      // Predicated region
      $region21: #{tpu_custom_call.1} parent=5 // pred_check
        %p148 = pneg %p147
      $region22: #{tpu_custom_call.1} parent=5 // pred_check_branch
        %150 = sbr.rel (%p148) target = $region24
      $region23: #{tpu_custom_call.1} parent=5 // pred_region
        // Predicated region
        $region25: #{tpu_custom_call.1} parent=23 // pred_check
          %p151 = pneg %p36
        $region26: #{tpu_custom_call.1} parent=23 // pred_check_branch
          %153 = sbr.rel (%p151) target = $region28
        $region27: #{tpu_custom_call.1} parent=23 // pred_region
          %s154 = sand.u32 %s26, 1
          %s155 = scalar_lea.sflag [#allocation3], %s154
          %s156 = sand.u32 %s26, 1
          %s157 = smul.addr %s156, 128
          %s158 = scalar_lea.vmem [#allocation2], %s157
          %s160 = ssub.s32 2048, 2048
          %161 = vsyncadd %s155, %s160
          %s162 = smul.addr %s16, 16
          %s163 = smul.addr %s162, 128
          %s164 = scalar_lea.hbm %s0, %s163
          %s166 = sshll.u32 %s158, 4
          %s167 = int_to_ptr.vmem [resolvable:$true] %s166
          %169 = dma.hbm_to_vmem [thread:$0]  %s164, 2048, %s167, %s155
        $region28: #{tpu_custom_call.1} parent=23 // pred_fallthru
          _
      $region24: #{tpu_custom_call.1} parent=5 // pred_fallthru
        _
      %p170 = scmp.le.s32.totalorder 1, %s16
      %p171 = scmp.lt.s32.totalorder %s16, 3
      %p172 = pnand %p170, %p171
      %p173 = pneg %p172
      // Predicated region
      $region29: #{tpu_custom_call.1} parent=5 // pred_check
        _
      $region30: #{tpu_custom_call.1} parent=5 // pred_check_branch
        %175 = sbr.rel (%p172) target = $region32
      $region31: #{tpu_custom_call.1} parent=5 // pred_region
        %s176 = ssub.s32 %s16, 1
        %s177 = sand.u32 %s29, 1
        %s178 = scalar_lea.sflag [#allocation3], %s177
        %s179 = sand.u32 %s29, 1
        %s180 = smul.addr %s179, 128
        %s181 = scalar_lea.vmem [#allocation2], %s180
        // Predicated region
        $region33: #{tpu_custom_call.1} parent=31 // pred_check
          %p182 = pneg %p42
        $region34: #{tpu_custom_call.1} parent=31 // pred_check_branch
          %184 = sbr.rel (%p182) target = $region36
        $region35: #{tpu_custom_call.1} parent=31 // pred_region
          %185 = dma.done %s178, 2048
        $region36: #{tpu_custom_call.1} parent=31 // pred_fallthru
          _
        // Predicated region
        $region37: #{tpu_custom_call.1} parent=31 // pred_check
          %p186 = pneg %p63
        $region38: #{tpu_custom_call.1} parent=31 // pred_check_branch
          %188 = sbr.rel (%p186) target = $region40
        $region39: #{tpu_custom_call.1} parent=31 // pred_region
          %189 = dma.done [#allocation6], 256
        $region40: #{tpu_custom_call.1} parent=31 // pred_fallthru
          _
        // Predicated region
        $region41: #{tpu_custom_call.1} parent=31 // pred_check
          %p190 = pneg %p84
        $region42: #{tpu_custom_call.1} parent=31 // pred_check_branch
          %192 = sbr.rel (%p190) target = $region44
        $region43: #{tpu_custom_call.1} parent=31 // pred_region
          %193 = dma.done [#allocation6], 256
        $region44: #{tpu_custom_call.1} parent=31 // pred_fallthru
          _
        %s194 = sand.u32 %s29, 1
        %s195 = scalar_lea.sflag [#allocation3], %s194
        %s196 = sand.u32 %s29, 1
        %s197 = smul.addr %s196, 128
        %s198 = scalar_lea.vmem [#allocation2], %s197
        %p199 = pneg %p42
        %p200 = pneg %p39
        %p201 = pneg %p63
        %p202 = pneg %p60
        %p203 = pneg %p84
        %p204 = pneg %p81
        %p205 = pneg %p110
        %p206 = pneg %p107
        %s207 = sand.u32 %s97, 1
        %s208 = scalar_lea.sflag [#allocation4], %s207
        %s209 = sand.u32 %s97, 1
        %s210 = smul.addr %s209, 128
        %s211 = scalar_lea.vmem [#allocation8], %s210
        %v212 = vld [vmem:[%s181] sm:$0xff]
        %v213 = vld [vmem:[%s181 + $0x8] sm:$0xff]
        %v214 = vld [vmem:[%s181 + $0x10] sm:$0xff]
        %v215 = vld [vmem:[%s181 + $0x18] sm:$0xff]
        %v216 = vld [vmem:[%s181 + $0x20] sm:$0xff]
        %v217 = vld [vmem:[%s181 + $0x28] sm:$0xff]
        %v218 = vld [vmem:[%s181 + $0x30] sm:$0xff]
        %v219 = vld [vmem:[%s181 + $0x38] sm:$0xff]
        %v220 = vld [vmem:[%s181 + $0x40] sm:$0xff]
        %v221 = vld [vmem:[%s181 + $0x48] sm:$0xff]
        %v222 = vld [vmem:[%s181 + $0x50] sm:$0xff]
        %v223 = vld [vmem:[%s181 + $0x58] sm:$0xff]
        %v224 = vld [vmem:[%s181 + $0x60] sm:$0xff]
        %v225 = vld [vmem:[%s181 + $0x68] sm:$0xff]
        %v226 = vld [vmem:[%s181 + $0x70] sm:$0xff]
        %v227 = vld [vmem:[%s181 + $0x78] sm:$0xff]
        %v228 = vadd.f32 %v212, %v213
        %v229 = vadd.f32 %v228, %v214
        %v230 = vadd.f32 %v229, %v215
        %v231 = vadd.f32 %v230, %v216
        %v232 = vadd.f32 %v231, %v217
        %v233 = vadd.f32 %v232, %v218
        %v234 = vadd.f32 %v233, %v219
        %v235 = vadd.f32 %v234, %v220
        %v236 = vadd.f32 %v235, %v221
        %v237 = vadd.f32 %v236, %v222
        %v238 = vadd.f32 %v237, %v223
        %v239 = vadd.f32 %v238, %v224
        %v240 = vadd.f32 %v239, %v225
        %v241 = vadd.f32 %v240, %v226
        %v242 = vadd.f32 %v241, %v227
        %243 = vadd.xlane.f32.xlu0 %v242
        %v244 = vpop.xlane.xlu0 %243
        %v245 = vmul.f32 %v212, %v212
        %v246 = vmul.f32 %v213, %v213
        %v247 = vmul.f32 %v214, %v214
        %v248 = vmul.f32 %v215, %v215
        %v249 = vmul.f32 %v216, %v216
        %v250 = vmul.f32 %v217, %v217
        %v251 = vmul.f32 %v218, %v218
        %v252 = vmul.f32 %v219, %v219
        %v253 = vmul.f32 %v220, %v220
        %v254 = vmul.f32 %v221, %v221
        %v255 = vmul.f32 %v222, %v222
        %v256 = vmul.f32 %v223, %v223
        %v257 = vmul.f32 %v224, %v224
        %v258 = vmul.f32 %v225, %v225
        %v259 = vmul.f32 %v226, %v226
        %v260 = vmul.f32 %v227, %v227
        %v261 = vadd.f32 %v245, %v246
        %v262 = vadd.f32 %v261, %v247
        %v263 = vadd.f32 %v262, %v248
        %v264 = vadd.f32 %v263, %v249
        %v265 = vadd.f32 %v264, %v250
        %v266 = vadd.f32 %v265, %v251
        %v267 = vadd.f32 %v266, %v252
        %v268 = vadd.f32 %v267, %v253
        %v269 = vadd.f32 %v268, %v254
        %v270 = vadd.f32 %v269, %v255
        %v271 = vadd.f32 %v270, %v256
        %v272 = vadd.f32 %v271, %v257
        %v273 = vadd.f32 %v272, %v258
        %v274 = vadd.f32 %v273, %v259
        %v275 = vadd.f32 %v274, %v260
        %276 = vadd.xlane.f32.xlu0 %v275
        %v277 = vpop.xlane.xlu0 %276
        %v278 = vmul.f32 %v244, 0.00048828125
        %v279 = vmul.f32 %v277, 0.00048828125
        %v280 = vmul.f32 %v278, %v278
        %v281 = vsub.f32 %v279, %v280
        %v282 = vmax.f32 %v281, 0.0
        %v283 = vadd.f32 %v282, 1e-05
        %v284 = vrsqrt.pop %v283
        %v285 = vld [vmem:[#allocation5] sm:$0xff]
        %v286 = vld [vmem:[#allocation5 + $0x8] sm:$0xff]
        %v287 = vld [vmem:[#allocation7] sm:$0xff]
        %v288 = vld [vmem:[#allocation7 + $0x8] sm:$0xff]
        %v289 = vsub.f32 %v212, %v278
        %v290 = vsub.f32 %v213, %v278
        %v291 = vsub.f32 %v214, %v278
        %v292 = vsub.f32 %v215, %v278
        %v293 = vsub.f32 %v216, %v278
        %v294 = vsub.f32 %v217, %v278
        %v295 = vsub.f32 %v218, %v278
        %v296 = vsub.f32 %v219, %v278
        %v297 = vsub.f32 %v220, %v278
        %v298 = vsub.f32 %v221, %v278
        %v299 = vsub.f32 %v222, %v278
        %v300 = vsub.f32 %v223, %v278
        %v301 = vsub.f32 %v224, %v278
        %v302 = vsub.f32 %v225, %v278
        %v303 = vsub.f32 %v226, %v278
        %v304 = vsub.f32 %v227, %v278
        %v305 = vmul.f32 %v289, %v284
        %v306 = vmul.f32 %v290, %v284
        %v307 = vmul.f32 %v291, %v284
        %v308 = vmul.f32 %v292, %v284
        %v309 = vmul.f32 %v293, %v284
        %v310 = vmul.f32 %v294, %v284
        %v311 = vmul.f32 %v295, %v284
        %v312 = vmul.f32 %v296, %v284
        %v313 = vmul.f32 %v297, %v284
        %v314 = vmul.f32 %v298, %v284
        %v315 = vmul.f32 %v299, %v284
        %v316 = vmul.f32 %v300, %v284
        %v317 = vmul.f32 %v301, %v284
        %v318 = vmul.f32 %v302, %v284
        %v319 = vmul.f32 %v303, %v284
        %v320 = vmul.f32 %v304, %v284
        %v323 = vlaneseq
        %v324 = vshrl.u32 %v323, 7
        %v325 = vsub.s32 0, %v324
        %v326 = vrot.slane %v285, %v325
        %v327 = vlaneseq
        %v328 = vshrl.u32 %v327, 7
        %v329 = vsub.s32 1, %v328
        %v330 = vrot.slane %v285, %v329
        %v331 = vlaneseq
        %v332 = vshrl.u32 %v331, 7
        %v333 = vsub.s32 2, %v332
        %v334 = vrot.slane %v285, %v333
        %v335 = vlaneseq
        %v336 = vshrl.u32 %v335, 7
        %v337 = vsub.s32 3, %v336
        %v338 = vrot.slane %v285, %v337
        %v339 = vlaneseq
        %v340 = vshrl.u32 %v339, 7
        %v341 = vsub.s32 4, %v340
        %v342 = vrot.slane %v285, %v341
        %v343 = vlaneseq
        %v344 = vshrl.u32 %v343, 7
        %v345 = vsub.s32 5, %v344
        %v346 = vrot.slane %v285, %v345
        %v347 = vlaneseq
        %v348 = vshrl.u32 %v347, 7
        %v349 = vsub.s32 6, %v348
        %v350 = vrot.slane %v285, %v349
        %v351 = vlaneseq
        %v352 = vshrl.u32 %v351, 7
        %v353 = vsub.s32 7, %v352
        %v354 = vrot.slane %v285, %v353
        %v355 = vlaneseq
        %v356 = vshrl.u32 %v355, 7
        %v357 = vsub.s32 0, %v356
        %v358 = vrot.slane %v286, %v357
        %v359 = vlaneseq
        %v360 = vshrl.u32 %v359, 7
        %v361 = vsub.s32 1, %v360
        %v362 = vrot.slane %v286, %v361
        %v363 = vlaneseq
        %v364 = vshrl.u32 %v363, 7
        %v365 = vsub.s32 2, %v364
        %v366 = vrot.slane %v286, %v365
        %v367 = vlaneseq
        %v368 = vshrl.u32 %v367, 7
        %v369 = vsub.s32 3, %v368
        %v370 = vrot.slane %v286, %v369
        %v371 = vlaneseq
        %v372 = vshrl.u32 %v371, 7
        %v373 = vsub.s32 4, %v372
        %v374 = vrot.slane %v286, %v373
        %v375 = vlaneseq
        %v376 = vshrl.u32 %v375, 7
        %v377 = vsub.s32 5, %v376
        %v378 = vrot.slane %v286, %v377
        %v379 = vlaneseq
        %v380 = vshrl.u32 %v379, 7
        %v381 = vsub.s32 6, %v380
        %v382 = vrot.slane %v286, %v381
        %v383 = vlaneseq
        %v384 = vshrl.u32 %v383, 7
        %v385 = vsub.s32 7, %v384
        %v386 = vrot.slane %v286, %v385
        %v403 = vmul.f32 %v305, %v326
        %v404 = vmul.f32 %v306, %v330
        %v405 = vmul.f32 %v307, %v334
        %v406 = vmul.f32 %v308, %v338
        %v407 = vmul.f32 %v309, %v342
        %v408 = vmul.f32 %v310, %v346
        %v409 = vmul.f32 %v311, %v350
        %v410 = vmul.f32 %v312, %v354
        %v411 = vmul.f32 %v313, %v358
        %v412 = vmul.f32 %v314, %v362
        %v413 = vmul.f32 %v315, %v366
        %v414 = vmul.f32 %v316, %v370
        %v415 = vmul.f32 %v317, %v374
        %v416 = vmul.f32 %v318, %v378
        %v417 = vmul.f32 %v319, %v382
        %v418 = vmul.f32 %v320, %v386
        %v421 = vlaneseq
        %v422 = vshrl.u32 %v421, 7
        %v423 = vsub.s32 0, %v422
        %v424 = vrot.slane %v287, %v423
        %v425 = vlaneseq
        %v426 = vshrl.u32 %v425, 7
        %v427 = vsub.s32 1, %v426
        %v428 = vrot.slane %v287, %v427
        %v429 = vlaneseq
        %v430 = vshrl.u32 %v429, 7
        %v431 = vsub.s32 2, %v430
        %v432 = vrot.slane %v287, %v431
        %v433 = vlaneseq
        %v434 = vshrl.u32 %v433, 7
        %v435 = vsub.s32 3, %v434
        %v436 = vrot.slane %v287, %v435
        %v437 = vlaneseq
        %v438 = vshrl.u32 %v437, 7
        %v439 = vsub.s32 4, %v438
        %v440 = vrot.slane %v287, %v439
        %v441 = vlaneseq
        %v442 = vshrl.u32 %v441, 7
        %v443 = vsub.s32 5, %v442
        %v444 = vrot.slane %v287, %v443
        %v445 = vlaneseq
        %v446 = vshrl.u32 %v445, 7
        %v447 = vsub.s32 6, %v446
        %v448 = vrot.slane %v287, %v447
        %v449 = vlaneseq
        %v450 = vshrl.u32 %v449, 7
        %v451 = vsub.s32 7, %v450
        %v452 = vrot.slane %v287, %v451
        %v453 = vlaneseq
        %v454 = vshrl.u32 %v453, 7
        %v455 = vsub.s32 0, %v454
        %v456 = vrot.slane %v288, %v455
        %v457 = vlaneseq
        %v458 = vshrl.u32 %v457, 7
        %v459 = vsub.s32 1, %v458
        %v460 = vrot.slane %v288, %v459
        %v461 = vlaneseq
        %v462 = vshrl.u32 %v461, 7
        %v463 = vsub.s32 2, %v462
        %v464 = vrot.slane %v288, %v463
        %v465 = vlaneseq
        %v466 = vshrl.u32 %v465, 7
        %v467 = vsub.s32 3, %v466
        %v468 = vrot.slane %v288, %v467
        %v469 = vlaneseq
        %v470 = vshrl.u32 %v469, 7
        %v471 = vsub.s32 4, %v470
        %v472 = vrot.slane %v288, %v471
        %v473 = vlaneseq
        %v474 = vshrl.u32 %v473, 7
        %v475 = vsub.s32 5, %v474
        %v476 = vrot.slane %v288, %v475
        %v477 = vlaneseq
        %v478 = vshrl.u32 %v477, 7
        %v479 = vsub.s32 6, %v478
        %v480 = vrot.slane %v288, %v479
        %v481 = vlaneseq
        %v482 = vshrl.u32 %v481, 7
        %v483 = vsub.s32 7, %v482
        %v484 = vrot.slane %v288, %v483
        %v501 = vadd.f32 %v403, %v424
        %v502 = vadd.f32 %v404, %v428
        %v503 = vadd.f32 %v405, %v432
        %v504 = vadd.f32 %v406, %v436
        %v505 = vadd.f32 %v407, %v440
        %v506 = vadd.f32 %v408, %v444
        %v507 = vadd.f32 %v409, %v448
        %v508 = vadd.f32 %v410, %v452
        %v509 = vadd.f32 %v411, %v456
        %v510 = vadd.f32 %v412, %v460
        %v511 = vadd.f32 %v413, %v464
        %v512 = vadd.f32 %v414, %v468
        %v513 = vadd.f32 %v415, %v472
        %v514 = vadd.f32 %v416, %v476
        %v515 = vadd.f32 %v417, %v480
        %v516 = vadd.f32 %v418, %v484
        %517 = vst [vmem:[%s211] sm:$0xff] %v501
        %518 = vst [vmem:[%s211 + $0x8] sm:$0xff] %v502
        %519 = vst [vmem:[%s211 + $0x10] sm:$0xff] %v503
        %520 = vst [vmem:[%s211 + $0x18] sm:$0xff] %v504
        %521 = vst [vmem:[%s211 + $0x20] sm:$0xff] %v505
        %522 = vst [vmem:[%s211 + $0x28] sm:$0xff] %v506
        %523 = vst [vmem:[%s211 + $0x30] sm:$0xff] %v507
        %524 = vst [vmem:[%s211 + $0x38] sm:$0xff] %v508
        %525 = vst [vmem:[%s211 + $0x40] sm:$0xff] %v509
        %526 = vst [vmem:[%s211 + $0x48] sm:$0xff] %v510
        %527 = vst [vmem:[%s211 + $0x50] sm:$0xff] %v511
        %528 = vst [vmem:[%s211 + $0x58] sm:$0xff] %v512
        %529 = vst [vmem:[%s211 + $0x60] sm:$0xff] %v513
        %530 = vst [vmem:[%s211 + $0x68] sm:$0xff] %v514
        %531 = vst [vmem:[%s211 + $0x70] sm:$0xff] %v515
        %532 = vst [vmem:[%s211 + $0x78] sm:$0xff] %v516
        %s533 = sand.u32 %s97, 1
        %s534 = scalar_lea.sflag [#allocation4], %s533
        %s535 = sand.u32 %s97, 1
        %s536 = smul.addr %s535, 128
        %s537 = scalar_lea.vmem [#allocation8], %s536
        // Predicated region
        $region45: #{tpu_custom_call.1} parent=31 // pred_check
          %p538 = pneg %p107
        $region46: #{tpu_custom_call.1} parent=31 // pred_check_branch
          %540 = sbr.rel (%p538) target = $region48
        $region47: #{tpu_custom_call.1} parent=31 // pred_region
          %s542 = ssub.s32 2048, 2048
          %543 = vsyncadd %s534, %s542
          %s544 = smul.addr %s21, 16
          %s545 = smul.addr %s544, 128
          %s546 = scalar_lea.hbm %s3, %s545
          %s548 = sshll.u32 %s537, 4
          %s549 = int_to_ptr.vmem [resolvable:$true] %s548
          %551 = dma.vmem_to_hbm [thread:$0]  %s549, 2048, %s546, %s534
        $region48: #{tpu_custom_call.1} parent=31 // pred_fallthru
          _
      $region32: #{tpu_custom_call.1} parent=5 // pred_fallthru
        _
      %p552 = scmp.le.s32.totalorder 2, %s16
      // Predicated region
      $region49: #{tpu_custom_call.1} parent=5 // pred_check
        %p553 = pneg %p552
      $region50: #{tpu_custom_call.1} parent=5 // pred_check_branch
        %555 = sbr.rel (%p553) target = $region52
      $region51: #{tpu_custom_call.1} parent=5 // pred_region
        %s556 = ssub.s32 %s16, 2
        // Predicated region
        $region53: #{tpu_custom_call.1} parent=51 // pred_check
          %p557 = pneg %p113
        $region54: #{tpu_custom_call.1} parent=51 // pred_check_branch
          %559 = sbr.rel (%p557) target = $region56
        $region55: #{tpu_custom_call.1} parent=51 // pred_region
          %s560 = sand.u32 %s98, 1
          %s561 = scalar_lea.sflag [#allocation4], %s560
          %s562 = sand.u32 %s98, 1
          %s563 = smul.addr %s562, 128
          %s564 = scalar_lea.vmem [#allocation8], %s563
          %565 = dma.done %s561, 2048
        $region56: #{tpu_custom_call.1} parent=51 // pred_fallthru
          _
      $region52: #{tpu_custom_call.1} parent=5 // pred_fallthru
        _
    $region6: #{tpu_custom_call.1} parent=1 // loop_footer
      %s20 = sadd.s32 1, %s16
    $region7: #{tpu_custom_call.1} parent=1 // loop_footer_branch
      %15 = sbr.rel target = $region3
    $region8: #{tpu_custom_call.1} parent=1 // loop_exit
      _
    %566 = vsyncpa [#allocation3], 1
    %s567 = scalar_lea.sflag [#allocation3], 1
    %568 = vsyncpa %s567, 1
    %569 = vsyncpa [#allocation6], 1
    %570 = vsyncpa [#allocation4], 1
    %s571 = scalar_lea.sflag [#allocation4], 1
    %572 = vsyncpa %s571, 1

</llo_original>
